<compile_context>
chip_gen: v7x
topology: tpu7x:2x2x1
jax: 0.10.0
libtpu: 0.0.40
codegen_flags: <defaults>
</compile_context>

<pallas_src>
from functools import partial

import jax
import jax.numpy as jnp
from jax import lax
from jax.experimental import pallas as pl
from jax.experimental.pallas import tpu as pltpu


# --------------------------------------------------------------------------- #
# Kernels
# --------------------------------------------------------------------------- #
def _mbstd_main_kernel(x_ref, o_ref, part_ref, *, group_size, n_members,
                       total_cols, alpha):
    """Copy one (B, tile) slab of x into the output and emit its stats partial."""
    i = pl.program_id(0)
    G, n = group_size, n_members
    _, tile = x_ref.shape
    inv_g = 1.0 / G

    x = x_ref[...]                                      # (B, tile), input dtype
    o_ref[...] = x                                      # lane-dense unmasked copy

    # Stats in f32.  b = g*n + m matches torch.reshape(x, [G, -1, C, H, W]).
    y = x.astype(jnp.float32).reshape(G, n, tile)
    mu = jnp.sum(y, axis=0, keepdims=True) * inv_g      # group mean
    d = y - mu
    var = jnp.sum(d * d, axis=0) * inv_g                # biased var, (n, tile)
    s = jnp.sqrt(var + alpha)

    # Mask columns past the true feature width (ragged last tile reads padding).
    col = lax.broadcasted_iota(jnp.int32, (1, tile), 1) + i * tile
    s = jnp.where(col < total_cols, s, 0.0)

    part = jnp.sum(s, axis=-1, keepdims=True)           # (n, 1) per-member partial
    part_ref[...] = jnp.broadcast_to(part, (1, n, 128))


def _mbstd_tail_kernel(std_ref, o_alias, o_hbm, buf, sem, *, feat_cols,
                       spatial, chunk):
    """Broadcast the per-row std into output columns [F, F+HW) via manual DMA."""
    del o_alias                                          # same HBM buffer as o_hbm
    B = buf.shape[0]
    buf[...] = jnp.broadcast_to(std_ref[...], (B, chunk)).astype(buf.dtype)

    n_full = spatial // chunk                            # static python ints
    rem = spatial - n_full * chunk

    @pl.loop(0, n_full)
    def _(k):
        cp = pltpu.make_async_copy(
            buf, o_hbm.at[:, pl.ds(feat_cols + k * chunk, chunk)], sem.at[0])
        cp.start()
        cp.wait()

    if rem:
        cp = pltpu.make_async_copy(
            buf.at[:, pl.ds(0, rem)],
            o_hbm.at[:, pl.ds(feat_cols + n_full * chunk, rem)], sem.at[0])
        cp.start()
        cp.wait()


# --------------------------------------------------------------------------- #
# Tiling heuristics
# --------------------------------------------------------------------------- #
def _round_up(a, m):
    return (a + m - 1) // m * m


def _gen_params():
    """(per-block byte target, scoped-VMEM limit) tuned per TPU generation."""
    try:
        kind = jax.devices()[0].device_kind.lower()
    except Exception:                                    # pragma: no cover
        kind = ""
    if ("v5e" in kind) or ("v5 lite" in kind) or ("v5lite" in kind):
        return 2 << 20, 32 << 20     # v5e: 128 MiB physical, small default scope
    if "v6" in kind:
        return 4 << 20, 64 << 20     # v6e: 128 MiB physical VMEM
    if "7" in kind:
        return 3 << 20, 40 << 20     # v7x: only 64 MiB physical VMEM per TC
    return 2 << 20, 32 << 20         # unknown generation: conservative


def _pick_tile_cols(feat_cols, batch, itemsize, requested, target_bytes):
    """Largest 128-multiple column tile fitting the per-block byte budget."""
    if requested is not None:
        if requested % 128 != 0:
            raise ValueError(f"tile_cols={requested} must be a multiple of 128")
        return requested
    cap = max(128, (target_bytes // max(1, batch * itemsize)) // 128 * 128)
    tile = min(cap, _round_up(feat_cols, 128))
    # Prefer a nearby exact divisor (avoids a ragged, partly-masked last tile),
    # but never shrink below half the cap -- small tiles cost more than masking.
    if feat_cols % tile != 0 and feat_cols % 128 == 0:
        m = tile
        while m >= max(128, tile // 2):
            if feat_cols % m == 0:
                return m
            m -= 128
    return tile


# --------------------------------------------------------------------------- #
# Public wrapper
# --------------------------------------------------------------------------- #
@partial(jax.jit, static_argnames=("group_size", "alpha", "tile_cols"))
def minibatch_stddev(x, group_size: int = 4, alpha: float = 1e-8,
                     tile_cols=None):
    """x: (B, C, H, W) -> (B, C+1, H, W); matches MinibatchStdDev.forward."""
    B, C, H, W = x.shape
    assert B % group_size == 0 or B < group_size, (
        f"batch_size ({B}) must be fully divisible by group_size ({group_size}) "
        f"or less than it")
    G = min(B, group_size)
    n = B // G
    F = C * H * W
    HW = H * W
    itemsize = jnp.dtype(x.dtype).itemsize

    target_block_bytes, vmem_limit = _gen_params()
    tile = _pick_tile_cols(F, B, itemsize, tile_cols, target_block_bytes)
    n_blk = pl.cdiv(F, tile)

    x_flat = x.reshape(B, F)                             # free, row-major

    # ---- call 1: copy x into the output + per-tile stats partials ---------- #
    main_cost = pl.CostEstimate(
        flops=5 * B * F,
        transcendentals=n * F,                           # one sqrt per (member, pos)
        bytes_accessed=2 * B * F * itemsize,
    )
    out_main, partials = pl.pallas_call(
        partial(_mbstd_main_kernel, group_size=G, n_members=n,
                total_cols=F, alpha=alpha),
        out_shape=(jax.ShapeDtypeStruct((B, F + HW), x.dtype),
                   jax.ShapeDtypeStruct((n_blk, n, 128), jnp.float32)),
        grid=(n_blk,),
        in_specs=[pl.BlockSpec((B, tile), lambda i: (0, i))],
        out_specs=(pl.BlockSpec((B, tile), lambda i: (0, i)),
                   pl.BlockSpec((1, n, 128), lambda i: (i, 0, 0))),
        compiler_params=pltpu.CompilerParams(
            dimension_semantics=("parallel",),           # tiles are independent
            vmem_limit_bytes=vmem_limit),
        cost_estimate=main_cost,
    )(x_flat)

    # ---- tiny XLA glue: combine per-tile partials -> per-row std ----------- #
    std_m = jnp.sum(partials[:, :, 0], axis=0) * (1.0 / F)   # (n,) per member
    std_col = jnp.tile(std_m, (G,)).reshape(B, 1)             # row b -> member b % n

    # ---- call 2: write the std channel into the same buffer (aliased) ------ #
    chunk = min(HW, tile)
    out_flat = pl.pallas_call(
        partial(_mbstd_tail_kernel, feat_cols=F, spatial=HW, chunk=chunk),
        out_shape=jax.ShapeDtypeStruct((B, F + HW), x.dtype),
        grid=(1,),
        in_specs=[pl.BlockSpec((B, 1), lambda i: (0, 0)),
                  pl.BlockSpec(memory_space=pl.ANY)],
        out_specs=pl.BlockSpec(memory_space=pl.ANY),
        scratch_shapes=[pltpu.VMEM((B, chunk), x.dtype),
                        pltpu.SemaphoreType.DMA((1,))],
        input_output_aliases={1: 0},                     # out_main buffer reused
        compiler_params=pltpu.CompilerParams(
            dimension_semantics=("arbitrary",),
            vmem_limit_bytes=vmem_limit),
    )(std_col, out_main)

    return out_flat.reshape(B, C + 1, H, W)              # free, row-major


# --------------------------------------------------------------------------- #
# Pure-JAX reference (mirrors the PyTorch forward exactly)
# --------------------------------------------------------------------------- #
def _reference(x, group_size: int = 4, alpha: float = 1e-8):
    B, C, H, W = x.shape
    g = min(B, group_size)
    n = B // g
    y = x.reshape(g, n, C, H, W).astype(jnp.float32)
    y = y - jnp.mean(y, axis=0, keepdims=True)
    y = jnp.mean(y * y, axis=0)
    y = jnp.sqrt(y + alpha)
    y = jnp.mean(y, axis=(1, 2, 3), keepdims=True)       # (n, 1, 1, 1)
    y = jnp.tile(y, (g, 1, H, W)).astype(x.dtype)         # (B, 1, H, W)
    return jnp.concatenate([x, y], axis=1)


if __name__ == "__main__":
    key = jax.random.PRNGKey(0)
    k0, k1, k2 = jax.random.split(key, 3)

    # 1) Small shape consistent with the module: B=8, C=4, 16x16, group_size=4.
    x = jax.random.normal(k0, (8, 4, 16, 16), dtype=jnp.float32)
    out = jax.block_until_ready(minibatch_stddev(x, group_size=4, alpha=1e-8))
    ref = _reference(x, group_size=4, alpha=1e-8)
    assert out.shape == (8, 5, 16, 16), out.shape
    assert out.dtype == x.dtype, out.dtype
    assert jnp.allclose(out, ref, atol=1e-5, rtol=1e-5), "mismatch (default tile)"

    # 2) Force multiple column tiles -> cross-tile partial-sum combination and
    #    a multi-step 'parallel' main axis.
    out_t = jax.block_until_ready(
        minibatch_stddev(x, group_size=4, alpha=1e-8, tile_cols=256))
    assert jnp.allclose(out_t, ref, atol=1e-5, rtol=1e-5), "mismatch (tiled)"

    # 3) batch_size < group_size branch (G = B, single group member).
    x2 = jax.random.normal(k1, (2, 4, 16, 16), dtype=jnp.float32)
    out2 = jax.block_until_ready(minibatch_stddev(x2, group_size=4, alpha=1e-8))
    assert jnp.allclose(out2, _reference(x2, 4, 1e-8), atol=1e-5, rtol=1e-5), \
        "mismatch (B<group)"

    # 4) Ragged feature width: C*H*W=432 and H*W=144 are not multiples of 128
    #    -> masked last stats tile + unaligned tail DMA.
    x3 = jax.random.normal(k2, (8, 3, 12, 12), dtype=jnp.float32)
    out3 = jax.block_until_ready(minibatch_stddev(x3, group_size=4, alpha=1e-8))
    assert jnp.allclose(out3, _reference(x3, 4, 1e-8), atol=1e-5, rtol=1e-5), \
        "mismatch (ragged F)"

    print("KERNEL_OK")
</pallas_src>

<mosaic_0001>
module attributes {stable_mosaic.version = 11 : i64} {
  func.func @_mbstd_main_kernel(%arg0: i32, %arg1: memref<8x1024xf32, #tpu.memory_space<vmem>>, %arg2: memref<8x1024xf32, #tpu.memory_space<vmem>>, %arg3: memref<1x2x128xf32, #tpu.memory_space<vmem>>) attributes {dimension_semantics = [#tpu.dimension_semantics<parallel>], iteration_bounds = array<i64: 1>, scalar_prefetch = 0 : i64, scratch_operands = 0 : i64, tpu.core_type = #tpu.core_type<tc>, window_params = [{transform_indices = @transform_0, window_bounds = array<i64: 8, 1024>}, {transform_indices = @transform_1, window_bounds = array<i64: 8, 1024>}, {transform_indices = @transform_2, window_bounds = array<i64: 1, 2, 128>}]} {
    %c0 = arith.constant 0 : index
    %c0_0 = arith.constant 0 : index
    %0 = vector.load %arg1[%c0, %c0_0] : memref<8x1024xf32, #tpu.memory_space<vmem>>, vector<8x1024xf32>
    %c0_1 = arith.constant 0 : index
    %c0_2 = arith.constant 0 : index
    %1 = vector.load %arg2[%c0_1, %c0_2] : memref<8x1024xf32, #tpu.memory_space<vmem>>, vector<8x1024xf32>
    tpu.vector_store %arg2[%c0_1, %c0_2], %0 {strides = array<i32>} : memref<8x1024xf32, #tpu.memory_space<vmem>>, vector<8x1024xf32>,
    %2 = vector.shape_cast %0 : vector<8x1024xf32> to vector<4x2x1024xf32>
    %cst = arith.constant dense<0.000000e+00> : vector<2x1024xf32>
    %3 = vector.multi_reduction <add>, %2, %cst [0] : vector<4x2x1024xf32> to vector<2x1024xf32>
    %4 = vector.shape_cast %3 : vector<2x1024xf32> to vector<1x2x1024xf32>
    %cst_3 = arith.constant 2.500000e-01 : f32
    %5 = vector.broadcast %cst_3 : f32 to vector<1x2x1024xf32>
    %6 = arith.mulf %4, %5 : vector<1x2x1024xf32>
    %7 = vector.broadcast %6 : vector<1x2x1024xf32> to vector<4x2x1024xf32>
    %8 = arith.subf %2, %7 : vector<4x2x1024xf32>
    %9 = arith.mulf %8, %8 : vector<4x2x1024xf32>
    %cst_4 = arith.constant dense<0.000000e+00> : vector<2x1024xf32>
    %10 = vector.multi_reduction <add>, %9, %cst_4 [0] : vector<4x2x1024xf32> to vector<2x1024xf32>
    %cst_5 = arith.constant 2.500000e-01 : f32
    %11 = vector.broadcast %cst_5 : f32 to vector<2x1024xf32>
    %12 = arith.mulf %10, %11 : vector<2x1024xf32>
    %cst_6 = arith.constant 9.99999993E-9 : f32
    %13 = vector.broadcast %cst_6 : f32 to vector<2x1024xf32>
    %14 = arith.addf %12, %13 : vector<2x1024xf32>
    %15 = math.sqrt %14 : vector<2x1024xf32>
    %16 = tpu.iota {dimensions = array<i32: 1>} : vector<1x1024xi32>
    %c1024_i32 = arith.constant 1024 : i32
    %17 = arith.muli %arg0, %c1024_i32 : i32
    %18 = vector.broadcast %17 : i32 to vector<1x1024xi32>
    %19 = arith.addi %16, %18 : vector<1x1024xi32>
    %c1024_i32_7 = arith.constant 1024 : i32
    %20 = vector.broadcast %c1024_i32_7 : i32 to vector<1x1024xi32>
    %21 = arith.cmpi slt, %19, %20 : vector<1x1024xi32>
    %cst_8 = arith.constant 0.000000e+00 : f32
    %22 = vector.shape_cast %21 : vector<1x1024xi1> to vector<1x1024xi1>
    %23 = vector.broadcast %22 : vector<1x1024xi1> to vector<2x1024xi1>
    %24 = vector.broadcast %cst_8 : f32 to vector<2x1024xf32>
    %25 = arith.select %23, %15, %24 : vector<2x1024xi1>, vector<2x1024xf32>
    %cst_9 = arith.constant dense<0.000000e+00> : vector<2xf32>
    %26 = vector.multi_reduction <add>, %25, %cst_9 [1] : vector<2x1024xf32> to vector<2xf32>
    %27 = vector.shape_cast %26 : vector<2xf32> to vector<2x1xf32>
    %28 = vector.shape_cast %27 : vector<2x1xf32> to vector<1x2x1xf32>
    %29 = vector.broadcast %28 : vector<1x2x1xf32> to vector<1x2x128xf32>
    %c0_10 = arith.constant 0 : index
    %c0_11 = arith.constant 0 : index
    %c0_12 = arith.constant 0 : index
    %30 = vector.load %arg3[%c0_10, %c0_11, %c0_12] : memref<1x2x128xf32, #tpu.memory_space<vmem>>, vector<1x2x128xf32>
    tpu.vector_store %arg3[%c0_10, %c0_11, %c0_12], %29 {strides = array<i32>} : memref<1x2x128xf32, #tpu.memory_space<vmem>>, vector<1x2x128xf32>,
    return
  }
  func.func @transform_0(%arg0: i32) -> (i32, i32) {
    %c0_i32 = arith.constant 0 : i32
    %c0_i32_0 = arith.constant 0 : i32
    return %c0_i32, %arg0 : i32, i32
  }
  func.func @transform_1(%arg0: i32) -> (i32, i32) {
    %c0_i32 = arith.constant 0 : i32
    %c0_i32_0 = arith.constant 0 : i32
    return %c0_i32, %arg0 : i32, i32
  }
  func.func @transform_2(%arg0: i32) -> (i32, i32, i32) {
    %c0_i32 = arith.constant 0 : i32
    %c0_i32_0 = arith.constant 0 : i32
    %c0_i32_1 = arith.constant 0 : i32
    return %arg0, %c0_i32, %c0_i32_0 : i32, i32, i32
  }
}

module attributes {stable_mosaic.version = 11 : i64} {
  func.func @_mbstd_tail_kernel(%arg0: i32, %arg1: memref<8x1xf32, #tpu.memory_space<vmem>>, %arg2: memref<8x1280xf32, #tpu.memory_space<any>>, %arg3: memref<8x1280xf32, #tpu.memory_space<any>>, %arg4: memref<8x256xf32, #tpu.memory_space<vmem>>, %arg5: memref<1x!tpu.dma_semaphore, #tpu.memory_space<semaphore_mem>>) attributes {dimension_semantics = [#tpu.dimension_semantics<arbitrary>], iteration_bounds = array<i64: 1>, scalar_prefetch = 0 : i64, scratch_operands = 2 : i64, tpu.core_type = #tpu.core_type<tc>, window_params = [{pipeline_mode = #tpu.pipeline_mode<synchronous>, transform_indices = @transform_0, window_bounds = array<i64: 8, 1>}, {}, {}]} {
    %c0 = arith.constant 0 : index
    %c0_0 = arith.constant 0 : index
    %0 = vector.load %arg1[%c0, %c0_0] : memref<8x1xf32, #tpu.memory_space<vmem>>, vector<8x1xf32>
    %1 = vector.shape_cast %0 : vector<8x1xf32> to vector<8x1xf32>
    %2 = vector.broadcast %1 : vector<8x1xf32> to vector<8x256xf32>
    %c0_1 = arith.constant 0 : index
    %c0_2 = arith.constant 0 : index
    %3 = vector.load %arg4[%c0_1, %c0_2] : memref<8x256xf32, #tpu.memory_space<vmem>>, vector<8x256xf32>
    tpu.vector_store %arg4[%c0_1, %c0_2], %2 {strides = array<i32>} : memref<8x256xf32, #tpu.memory_space<vmem>>, vector<8x256xf32>,
    %c0_i32 = arith.constant 0 : i32
    %c1_i32 = arith.constant 1 : i32
    %4 = arith.muli %c0_i32, %c1_i32 : i32
    %c0_i32_3 = arith.constant 0 : i32
    %5 = arith.addi %c0_i32_3, %4 : i32
    %c256_i32 = arith.constant 256 : i32
    %6 = arith.muli %5, %c256_i32 : i32
    %c1024_i32 = arith.constant 1024 : i32
    %7 = arith.addi %c1024_i32, %6 : i32
    %c0_i32_4 = arith.constant 0 : i32
    %c0_i32_5 = arith.constant 0 : i32
    %8 = tpu.memref_slice %arg3[%c0_i32_5, %7] : memref<8x1280xf32, #tpu.memory_space<any>> -> memref<8x256xf32, #tpu.memory_space<any>>
    %9 = tpu.memref_slice %arg5[%c0_i32_4] : memref<1x!tpu.dma_semaphore, #tpu.memory_space<semaphore_mem>> -> memref<1x!tpu.dma_semaphore, #tpu.memory_space<semaphore_mem>>
    %10 = tpu.memref_squeeze %9 : memref<1x!tpu.dma_semaphore, #tpu.memory_space<semaphore_mem>> -> memref<!tpu.dma_semaphore, #tpu.memory_space<semaphore_mem>>
    tpu.enqueue_dma source(%arg4 : memref<8x256xf32, #tpu.memory_space<vmem>>) target(%8 : memref<8x256xf32, #tpu.memory_space<any>>) target_semaphore(%10 : memref<!tpu.dma_semaphore, #tpu.memory_space<semaphore_mem>>)
    %c0_i32_6 = arith.constant 0 : i32
    %c0_i32_7 = arith.constant 0 : i32
    %11 = tpu.memref_slice %arg3[%c0_i32_7, %7] : memref<8x1280xf32, #tpu.memory_space<any>> -> memref<8x256xf32, #tpu.memory_space<any>>
    %12 = tpu.memref_slice %arg5[%c0_i32_6] : memref<1x!tpu.dma_semaphore, #tpu.memory_space<semaphore_mem>> -> memref<1x!tpu.dma_semaphore, #tpu.memory_space<semaphore_mem>>
    %13 = tpu.memref_squeeze %12 : memref<1x!tpu.dma_semaphore, #tpu.memory_space<semaphore_mem>> -> memref<!tpu.dma_semaphore, #tpu.memory_space<semaphore_mem>>
    tpu.wait_dma2 semaphore(%13 : memref<!tpu.dma_semaphore, #tpu.memory_space<semaphore_mem>>) src(%arg4 : memref<8x256xf32, #tpu.memory_space<vmem>>) dst(%11 : memref<8x256xf32, #tpu.memory_space<any>>)
    %c1_i32_8 = arith.constant 1 : i32
    return
  }
  func.func @transform_0(%arg0: i32) -> (i32, i32) {
    %c0_i32 = arith.constant 0 : i32
    %c0_i32_0 = arith.constant 0 : i32
    %c0_i32_1 = arith.constant 0 : i32
    return %c0_i32, %c0_i32_0 : i32, i32
  }
}

</mosaic_0001>

<llo_original>
// kernel: tile.8
$region0: #{tile.8}
  #allocation0 [shape = 's32[1]{0}', space=sflag, size = 0x4, scoped, tag = 'scoped memory for tile.8']
  %s0 = inlined_call_operand.vmem [shape: f32[2], index: 0, kind: input, shape index: {}]
  %s1 = inlined_call_operand.vmem [shape: f32[4,2], index: 1, kind: output, shape index: {}]
  // Predicated region
  $region2: #{tile.8} parent=0 // pred_check
    _
  $region3: #{tile.8} parent=0 // pred_check_branch
    %3 = sbr.rel (0) target = $region5
  $region4: #{tile.8} parent=0 // pred_region
    _
  $region5: #{tile.8} parent=0 // pred_fallthru
    _
  %v4 = vld [vmem:[%s0] ss:$0 sm:$0xff]
  %5 = vst [vmem:[%s1] sm:$0xf] %v4

// kernel: tile.0
$region0: #{tile.0}
  %s0 = inlined_call_operand.vmem [shape: f32[4,2], index: 0, kind: input, shape index: {}]
  %s1 = inlined_call_operand.vmem [shape: f32[8,1], index: 1, kind: output, shape index: {}]
  $region1: #{tile.0} parent=0
    #allocation0 [shape = 'u8[4096]{0}', space=vmem, size = 0x1000, scoped, tag = 'scoped mem for input reshape']
    %s3 = sshllo.u32 0, 4
    %v4 = vld [vmem:[%s0] sm:%s3]
    %5 = vst [vmem:[#allocation0] sm:%s3] %v4
    %v6 = vld [vmem:[#allocation0] sm:$0xf]
    %vm7 = vcmask 7168
    %8 = vst.msk [vmem:[%s1] ss:$2 sm:$0xf] %vm7, %v6
    %v9 = vld [vmem:[#allocation0] sm:$0xf]
    %10 = vrot.lane.b32.xlu0 %v9, 127
    %v11 = vpop.permute.xlu0 %10
    %vm12 = vcmask 7168
    %s13 = scalar_lea.vmem %s1, 1
    %14 = vst.msk [vmem:[%s13] ss:$2 sm:$0xf] %vm12, %v11

// kernel: minibatch_stddev.3
$region0: #{minibatch_stddev.3}
  #allocation0 [shape = 'u32[]', space=smem, size = 0x4, offset = 0x4, fixed_abs, tag = 'smem constant byte address 0x4 - core index']
  #allocation1 [shape = 'u32[144,128]{1,0:T(1,128)}', space=vmem, size = 0x12000, scoped, tag = 'internal scratch']
  #allocation2 [shape = 'f32[8,256]{1,0:T(8,128)}', space=vmem, size = 0x2000, scoped, tag = 'scratch operand']
  #allocation3 [shape = 's32[1]{0}', space=sflag, size = 0x4, scoped, tag = 'scratch operand']
  #allocation4 [shape = 's32[]', space=sflag, size = 0x4, offset = 0, fixed_abs, tag = 'sflag constant byte address 0x0 - dummy sync flag']
  %s0 = inlined_call_operand.vmem [shape: f32[8,1], index: 0, kind: input, shape index: {}]
  %s1 = inlined_call_operand.vmem [shape: f32[8,1280], index: 1, kind: input, shape index: {}, may-alias: {1,2}]
  %s2 = inlined_call_operand.vmem [shape: f32[8,1280], index: 2, kind: output, shape index: {}, may-alias: {1,2}]
  %s3 = sld [smem:[#allocation0]]
  $region40: #{minibatch_stddev.3} parent=0
    _
  %s5 = ssub.s32 1, %s3
  %s6 = scalar_select 0, %s5, %s3
  // Predicated region
  $region2: #{minibatch_stddev.3} parent=0 // pred_check
    _
  $region3: #{minibatch_stddev.3} parent=0 // pred_check_branch
    %8 = sbr.rel (0) target = $region5
  $region4: #{minibatch_stddev.3} parent=0 // pred_region
    _
  $region5: #{minibatch_stddev.3} parent=0 // pred_fallthru
    _
  %v9 = vld [vmem:[%s0] sm:$0xff]
  %11 = vset.pattern.permute.xlu0 0
  %12 = vperm.xlu0 %11, %v9
  %v13 = vpop.permute.xlu0 %12
  %15 = vst [vmem:[#allocation2] sm:$0xff] %v13
  %16 = vst [vmem:[#allocation2 + $0x8] sm:$0xff] %v13
  %s17 = scalar_lea.vmem %s2, 64
  %p19 = scmp.lt.u32.totalorder 16, 8
  %p20 = pneg %p19
  // Predicated region
  $region6: #{minibatch_stddev.3} parent=0 // pred_check
    _
  $region7: #{minibatch_stddev.3} parent=0 // pred_check_branch
    %22 = sbr.rel (%p19) target = $region9
  $region8: #{minibatch_stddev.3} parent=0 // pred_region
    %s37 = sand.u32 16, 7
    %p38 = scmp.eq.s32.totalorder %s37, 0
    // Predicated region
    $region21: #{minibatch_stddev.3} parent=8 // pred_check
      %p39 = pneg %p38
    $region22: #{minibatch_stddev.3} parent=8 // pred_check_branch
      %41 = sbr.rel (%p39) target = $region24
    $region23: #{minibatch_stddev.3} parent=8 // pred_region
      loop: start=0, step=1, limit=1
      $region25: #{minibatch_stddev.3} parent=23 // loop_pre_header
        _
      $region26: #{minibatch_stddev.3} parent=23 // loop_header
        %s43 = sphi 0, %s47
        %p44 = scmp.ge.s32.totalorder %s43, 1
        %s48 = sphi [#allocation2], [#allocation2]
        %s49 = sphi %s17, %s17
      $region27: #{minibatch_stddev.3} parent=23 // loop_header_branch
        %46 = sbr.rel (%p44) target = $region31
      $region28: #{minibatch_stddev.3} parent=23 // loop_body
        %v50 = vld [vmem:[%s48] sm:$0xff]
        %51 = vst [vmem:[%s49] sm:$0xff] %v50
        %v52 = vld [vmem:[%s48 + $0x8] sm:$0xff]
        %53 = vst [vmem:[%s49 + $0x8] sm:$0xff] %v52
      $region29: #{minibatch_stddev.3} parent=23 // loop_footer
        %s47 = sadd.s32 1, %s43
      $region30: #{minibatch_stddev.3} parent=23 // loop_footer_branch
        %42 = sbr.rel target = $region26
      $region31: #{minibatch_stddev.3} parent=23 // loop_exit
        _
    $region24: #{minibatch_stddev.3} parent=8 // pred_fallthru
      _
    %p54 = pneg %p38
    // Predicated region
    $region32: #{minibatch_stddev.3} parent=8 // pred_check
      _
    $region33: #{minibatch_stddev.3} parent=8 // pred_check_branch
      %56 = sbr.rel (%p38) target = $region35
    $region34: #{minibatch_stddev.3} parent=8 // pred_region
      %s57 = sand.u32 16, 7
    $region35: #{minibatch_stddev.3} parent=8 // pred_fallthru
      _
  $region9: #{minibatch_stddev.3} parent=0 // pred_fallthru
    _
  // Predicated region
  $region10: #{minibatch_stddev.3} parent=0 // pred_check
    %p23 = pneg %p19
  $region11: #{minibatch_stddev.3} parent=0 // pred_check_branch
    %25 = sbr.rel (%p23) target = $region13
  $region12: #{minibatch_stddev.3} parent=0 // pred_region
    %s26 = sshllo.u32 0, 16
    loop: start=0, step=1, limit=1
    $region14: #{minibatch_stddev.3} parent=12 // loop_pre_header
      _
    $region15: #{minibatch_stddev.3} parent=12 // loop_header
      %s28 = sphi 0, %s32
      %p29 = scmp.ge.s32.totalorder %s28, 1
      %s33 = sphi [#allocation2], [#allocation2]
      %s34 = sphi %s17, %s17
    $region16: #{minibatch_stddev.3} parent=12 // loop_header_branch
      %31 = sbr.rel (%p29) target = $region20
    $region17: #{minibatch_stddev.3} parent=12 // loop_body
      %v35 = vld [vmem:[%s33] sm:%s26]
      %36 = vst [vmem:[%s34] sm:%s26] %v35
    $region18: #{minibatch_stddev.3} parent=12 // loop_footer
      %s32 = sadd.s32 1, %s28
    $region19: #{minibatch_stddev.3} parent=12 // loop_footer_branch
      %27 = sbr.rel target = $region15
    $region20: #{minibatch_stddev.3} parent=12 // loop_exit
      _
  $region13: #{minibatch_stddev.3} parent=0 // pred_fallthru
    _
  // Predicated region
  $region36: #{minibatch_stddev.3} parent=0 // pred_check
    _
  $region37: #{minibatch_stddev.3} parent=0 // pred_check_branch
    %60 = sbr.rel (0) target = $region39
  $region38: #{minibatch_stddev.3} parent=0 // pred_region
    %61 = vsyncadd [#allocation3], 256
  $region39: #{minibatch_stddev.3} parent=0 // pred_fallthru
    _
  %s62 = smul.u32 8, 1
  %s63 = smul.u32 %s62, 2
  %s64 = sshll.u32 %s63, 4
  %65 = dma.done [#allocation3], %s64
  %66 = vsyncmov [#allocation3]
  %s67 = vpop.sfrf %66
  %p68 = scmp.eq.s32.totalorder %s67, 0
  %p69 = pneg %p68
  %71 = shalt.err (%p69)

// kernel: minibatch_stddev.2
$region0: #{minibatch_stddev.2}
  #allocation0 [shape = 'u32[]', space=smem, size = 0x4, offset = 0x4, fixed_abs, tag = 'smem constant byte address 0x4 - core index']
  #allocation1 [shape = 'u32[144,128]{1,0:T(1,128)}', space=vmem, size = 0x12000, scoped, tag = 'internal scratch']
  %s0 = inlined_call_operand.vmem [shape: f32[8,1024], index: 0, kind: input, shape index: {}]
  %s1 = inlined_call_operand.vmem [shape: f32[8,1280], index: 1, kind: output, shape index: {0}]
  %s2 = inlined_call_operand.vmem [shape: f32[1,2,128], index: 2, kind: output, shape index: {1}]
  %3 = xla_tuple %s1, %s2
  %s4 = sld [smem:[#allocation0]]
  $region41: #{minibatch_stddev.2} parent=0
    _
  %s6 = ssub.s32 1, %s4
  %s7 = scalar_select 0, %s6, %s4
  $region1: #{minibatch_stddev.2} parent=0
    #allocation2 [shape = 'u8[32768]{0}', space=vmem, size = 0x8000, scoped, tag = 'output window, operand 0, single buffered']
    // Predicated region
    $region2: #{minibatch_stddev.2} parent=1 // pred_check
      _
    $region3: #{minibatch_stddev.2} parent=1 // pred_check_branch
      %9 = sbr.rel (0) target = $region5
    $region4: #{minibatch_stddev.2} parent=1 // pred_region
      _
    $region5: #{minibatch_stddev.2} parent=1 // pred_fallthru
      _
    %v10 = vld [vmem:[%s0] sm:$0xff]
    %v11 = vld [vmem:[%s0 + $0x8] sm:$0xff]
    %v12 = vld [vmem:[%s0 + $0x10] sm:$0xff]
    %v13 = vld [vmem:[%s0 + $0x18] sm:$0xff]
    %v14 = vld [vmem:[%s0 + $0x20] sm:$0xff]
    %v15 = vld [vmem:[%s0 + $0x28] sm:$0xff]
    %v16 = vld [vmem:[%s0 + $0x30] sm:$0xff]
    %v17 = vld [vmem:[%s0 + $0x38] sm:$0xff]
    %18 = vst [vmem:[#allocation2] sm:$0xff] %v10
    %19 = vst [vmem:[#allocation2 + $0x8] sm:$0xff] %v11
    %20 = vst [vmem:[#allocation2 + $0x10] sm:$0xff] %v12
    %21 = vst [vmem:[#allocation2 + $0x18] sm:$0xff] %v13
    %22 = vst [vmem:[#allocation2 + $0x20] sm:$0xff] %v14
    %23 = vst [vmem:[#allocation2 + $0x28] sm:$0xff] %v15
    %24 = vst [vmem:[#allocation2 + $0x30] sm:$0xff] %v16
    %25 = vst [vmem:[#allocation2 + $0x38] sm:$0xff] %v17
    %v34 = vcombine.low %v10, %v11
    %v35 = vcombine.high %v10, %v11
    %v36 = vcombine.low %v12, %v13
    %v37 = vcombine.high %v12, %v13
    %v39 = vunpack.c.l.s4 1983009808
    %v40 = vunpack.c.0.s8 %v39
    %v41 = vlaneseq
    %v42 = vshrl.u32 %v41, 7
    %v43 = vsub.s32 %v40, %v42
    %v44 = vrot.slane %v34, %v43
    %v46 = vunpack.c.l.s4 1983009808
    %v47 = vunpack.c.0.s8 %v46
    %v48 = vlaneseq
    %v49 = vshrl.u32 %v48, 7
    %v50 = vsub.s32 %v47, %v49
    %v51 = vrot.slane %v35, %v50
    %v53 = vunpack.c.l.s4 1983009808
    %v54 = vunpack.c.0.s8 %v53
    %v55 = vlaneseq
    %v56 = vshrl.u32 %v55, 7
    %v57 = vsub.s32 %v54, %v56
    %v58 = vrot.slane %v36, %v57
    %v60 = vunpack.c.l.s4 1983009808
    %v61 = vunpack.c.0.s8 %v60
    %v62 = vlaneseq
    %v63 = vshrl.u32 %v62, 7
    %v64 = vsub.s32 %v61, %v63
    %v65 = vrot.slane %v37, %v64
    %v66 = vcombine.low %v44, %v58
    %v67 = vcombine.high %v44, %v58
    %v68 = vcombine.low %v51, %v65
    %v69 = vcombine.high %v51, %v65
    %v70 = vcombine.low %v14, %v15
    %v71 = vcombine.high %v14, %v15
    %v72 = vcombine.low %v16, %v17
    %v73 = vcombine.high %v16, %v17
    %v75 = vunpack.c.l.s4 1983009808
    %v76 = vunpack.c.0.s8 %v75
    %v77 = vlaneseq
    %v78 = vshrl.u32 %v77, 7
    %v79 = vsub.s32 %v76, %v78
    %v80 = vrot.slane %v70, %v79
    %v82 = vunpack.c.l.s4 1983009808
    %v83 = vunpack.c.0.s8 %v82
    %v84 = vlaneseq
    %v85 = vshrl.u32 %v84, 7
    %v86 = vsub.s32 %v83, %v85
    %v87 = vrot.slane %v71, %v86
    %v89 = vunpack.c.l.s4 1983009808
    %v90 = vunpack.c.0.s8 %v89
    %v91 = vlaneseq
    %v92 = vshrl.u32 %v91, 7
    %v93 = vsub.s32 %v90, %v92
    %v94 = vrot.slane %v72, %v93
    %v96 = vunpack.c.l.s4 1983009808
    %v97 = vunpack.c.0.s8 %v96
    %v98 = vlaneseq
    %v99 = vshrl.u32 %v98, 7
    %v100 = vsub.s32 %v97, %v99
    %v101 = vrot.slane %v73, %v100
    %v102 = vcombine.low %v80, %v94
    %v103 = vcombine.high %v80, %v94
    %v104 = vcombine.low %v87, %v101
    %v105 = vcombine.high %v87, %v101
    %v114 = vcombine.high %v66, %v66
    %v116 = vunpack.c.l.s4 1983009808
    %v117 = vunpack.c.0.s8 %v116
    %v118 = vlaneseq
    %v119 = vshrl.u32 %v118, 7
    %v120 = vsub.s32 %v117, %v119
    %v121 = vrot.slane %v66, %v120
    %v123 = vunpack.c.l.s4 1983009808
    %v124 = vunpack.c.0.s8 %v123
    %v125 = vlaneseq
    %v126 = vshrl.u32 %v125, 7
    %v127 = vsub.s32 %v124, %v126
    %v128 = vrot.slane %v114, %v127
    %v129 = vcombine.high %v121, %v121
    %v130 = vcombine.high %v128, %v128
    %v131 = vcombine.high %v102, %v102
    %v133 = vunpack.c.l.s4 1983009808
    %v134 = vunpack.c.0.s8 %v133
    %v135 = vlaneseq
    %v136 = vshrl.u32 %v135, 7
    %v137 = vsub.s32 %v134, %v136
    %v138 = vrot.slane %v102, %v137
    %v140 = vunpack.c.l.s4 1983009808
    %v141 = vunpack.c.0.s8 %v140
    %v142 = vlaneseq
    %v143 = vshrl.u32 %v142, 7
    %v144 = vsub.s32 %v141, %v143
    %v145 = vrot.slane %v131, %v144
    %v146 = vcombine.high %v138, %v138
    %v147 = vcombine.high %v145, %v145
    %v148 = vcombine.high %v67, %v67
    %v150 = vunpack.c.l.s4 1983009808
    %v151 = vunpack.c.0.s8 %v150
    %v152 = vlaneseq
    %v153 = vshrl.u32 %v152, 7
    %v154 = vsub.s32 %v151, %v153
    %v155 = vrot.slane %v67, %v154
    %v157 = vunpack.c.l.s4 1983009808
    %v158 = vunpack.c.0.s8 %v157
    %v159 = vlaneseq
    %v160 = vshrl.u32 %v159, 7
    %v161 = vsub.s32 %v158, %v160
    %v162 = vrot.slane %v148, %v161
    %v163 = vcombine.high %v155, %v155
    %v164 = vcombine.high %v162, %v162
    %v165 = vcombine.high %v103, %v103
    %v167 = vunpack.c.l.s4 1983009808
    %v168 = vunpack.c.0.s8 %v167
    %v169 = vlaneseq
    %v170 = vshrl.u32 %v169, 7
    %v171 = vsub.s32 %v168, %v170
    %v172 = vrot.slane %v103, %v171
    %v174 = vunpack.c.l.s4 1983009808
    %v175 = vunpack.c.0.s8 %v174
    %v176 = vlaneseq
    %v177 = vshrl.u32 %v176, 7
    %v178 = vsub.s32 %v175, %v177
    %v179 = vrot.slane %v165, %v178
    %v180 = vcombine.high %v172, %v172
    %v181 = vcombine.high %v179, %v179
    %v182 = vcombine.high %v68, %v68
    %v184 = vunpack.c.l.s4 1983009808
    %v185 = vunpack.c.0.s8 %v184
    %v186 = vlaneseq
    %v187 = vshrl.u32 %v186, 7
    %v188 = vsub.s32 %v185, %v187
    %v189 = vrot.slane %v68, %v188
    %v191 = vunpack.c.l.s4 1983009808
    %v192 = vunpack.c.0.s8 %v191
    %v193 = vlaneseq
    %v194 = vshrl.u32 %v193, 7
    %v195 = vsub.s32 %v192, %v194
    %v196 = vrot.slane %v182, %v195
    %v197 = vcombine.high %v189, %v189
    %v198 = vcombine.high %v196, %v196
    %v199 = vcombine.high %v104, %v104
    %v201 = vunpack.c.l.s4 1983009808
    %v202 = vunpack.c.0.s8 %v201
    %v203 = vlaneseq
    %v204 = vshrl.u32 %v203, 7
    %v205 = vsub.s32 %v202, %v204
    %v206 = vrot.slane %v104, %v205
    %v208 = vunpack.c.l.s4 1983009808
    %v209 = vunpack.c.0.s8 %v208
    %v210 = vlaneseq
    %v211 = vshrl.u32 %v210, 7
    %v212 = vsub.s32 %v209, %v211
    %v213 = vrot.slane %v199, %v212
    %v214 = vcombine.high %v206, %v206
    %v215 = vcombine.high %v213, %v213
    %v216 = vcombine.high %v69, %v69
    %v218 = vunpack.c.l.s4 1983009808
    %v219 = vunpack.c.0.s8 %v218
    %v220 = vlaneseq
    %v221 = vshrl.u32 %v220, 7
    %v222 = vsub.s32 %v219, %v221
    %v223 = vrot.slane %v69, %v222
    %v225 = vunpack.c.l.s4 1983009808
    %v226 = vunpack.c.0.s8 %v225
    %v227 = vlaneseq
    %v228 = vshrl.u32 %v227, 7
    %v229 = vsub.s32 %v226, %v228
    %v230 = vrot.slane %v216, %v229
    %v231 = vcombine.high %v223, %v223
    %v232 = vcombine.high %v230, %v230
    %v233 = vcombine.high %v105, %v105
    %v235 = vunpack.c.l.s4 1983009808
    %v236 = vunpack.c.0.s8 %v235
    %v237 = vlaneseq
    %v238 = vshrl.u32 %v237, 7
    %v239 = vsub.s32 %v236, %v238
    %v240 = vrot.slane %v105, %v239
    %v242 = vunpack.c.l.s4 1983009808
    %v243 = vunpack.c.0.s8 %v242
    %v244 = vlaneseq
    %v245 = vshrl.u32 %v244, 7
    %v246 = vsub.s32 %v243, %v245
    %v247 = vrot.slane %v233, %v246
    %v248 = vcombine.high %v240, %v240
    %v249 = vcombine.high %v247, %v247
    %vm282 = vcmask 1041408
    %v283 = vsel %vm282, %v121, 0.0
    %v284 = vsel %vm282, %v155, 0.0
    %v285 = vadd.f32 %v283, %v284
    %v286 = vsel %vm282, %v189, 0.0
    %v287 = vadd.f32 %v285, %v286
    %v288 = vsel %vm282, %v223, 0.0
    %v289 = vadd.f32 %v287, %v288
    %v290 = vsel %vm282, %v129, 0.0
    %v291 = vsel %vm282, %v163, 0.0
    %v292 = vadd.f32 %v290, %v291
    %v293 = vsel %vm282, %v197, 0.0
    %v294 = vadd.f32 %v292, %v293
    %v295 = vsel %vm282, %v231, 0.0
    %v296 = vadd.f32 %v294, %v295
    %v297 = vsel %vm282, %v128, 0.0
    %v298 = vsel %vm282, %v162, 0.0
    %v299 = vadd.f32 %v297, %v298
    %v300 = vsel %vm282, %v196, 0.0
    %v301 = vadd.f32 %v299, %v300
    %v302 = vsel %vm282, %v230, 0.0
    %v303 = vadd.f32 %v301, %v302
    %v304 = vsel %vm282, %v130, 0.0
    %v305 = vsel %vm282, %v164, 0.0
    %v306 = vadd.f32 %v304, %v305
    %v307 = vsel %vm282, %v198, 0.0
    %v308 = vadd.f32 %v306, %v307
    %v309 = vsel %vm282, %v232, 0.0
    %v310 = vadd.f32 %v308, %v309
    %v311 = vsel %vm282, %v138, 0.0
    %v312 = vsel %vm282, %v172, 0.0
    %v313 = vadd.f32 %v311, %v312
    %v314 = vsel %vm282, %v206, 0.0
    %v315 = vadd.f32 %v313, %v314
    %v316 = vsel %vm282, %v240, 0.0
    %v317 = vadd.f32 %v315, %v316
    %v318 = vsel %vm282, %v146, 0.0
    %v319 = vsel %vm282, %v180, 0.0
    %v320 = vadd.f32 %v318, %v319
    %v321 = vsel %vm282, %v214, 0.0
    %v322 = vadd.f32 %v320, %v321
    %v323 = vsel %vm282, %v248, 0.0
    %v324 = vadd.f32 %v322, %v323
    %v325 = vsel %vm282, %v145, 0.0
    %v326 = vsel %vm282, %v179, 0.0
    %v327 = vadd.f32 %v325, %v326
    %v328 = vsel %vm282, %v213, 0.0
    %v329 = vadd.f32 %v327, %v328
    %v330 = vsel %vm282, %v247, 0.0
    %v331 = vadd.f32 %v329, %v330
    %v332 = vsel %vm282, %v147, 0.0
    %v333 = vsel %vm282, %v181, 0.0
    %v334 = vadd.f32 %v332, %v333
    %v335 = vsel %vm282, %v215, 0.0
    %v336 = vadd.f32 %v334, %v335
    %v337 = vsel %vm282, %v249, 0.0
    %v338 = vadd.f32 %v336, %v337
    %v339 = vmul.f32 %v289, 0.25
    %v340 = vmul.f32 %v296, 0.25
    %v341 = vmul.f32 %v303, 0.25
    %v342 = vmul.f32 %v310, 0.25
    %v343 = vmul.f32 %v317, 0.25
    %v344 = vmul.f32 %v324, 0.25
    %v345 = vmul.f32 %v331, 0.25
    %v346 = vmul.f32 %v338, 0.25
    %v355 = vcombine.low %v339, %v340
    %v356 = vcombine.low %v341, %v342
    %v358 = vunpack.c.l.s4 1983009808
    %v359 = vunpack.c.0.s8 %v358
    %v360 = vlaneseq
    %v361 = vshrl.u32 %v360, 7
    %v362 = vsub.s32 %v359, %v361
    %v363 = vrot.slane %v355, %v362
    %v365 = vunpack.c.l.s4 1983009808
    %v366 = vunpack.c.0.s8 %v365
    %v367 = vlaneseq
    %v368 = vshrl.u32 %v367, 7
    %v369 = vsub.s32 %v366, %v368
    %v370 = vrot.slane %v356, %v369
    %v371 = vcombine.low %v363, %v370
    %v372 = vcombine.low %v343, %v344
    %v373 = vcombine.low %v345, %v346
    %v375 = vunpack.c.l.s4 1983009808
    %v376 = vunpack.c.0.s8 %v375
    %v377 = vlaneseq
    %v378 = vshrl.u32 %v377, 7
    %v379 = vsub.s32 %v376, %v378
    %v380 = vrot.slane %v372, %v379
    %v382 = vunpack.c.l.s4 1983009808
    %v383 = vunpack.c.0.s8 %v382
    %v384 = vlaneseq
    %v385 = vshrl.u32 %v384, 7
    %v386 = vsub.s32 %v383, %v385
    %v387 = vrot.slane %v373, %v386
    %v388 = vcombine.low %v380, %v387
    %v391 = vsub.f32 %v66, %v371
    %v392 = vsub.f32 %v102, %v388
    %v393 = vsub.f32 %v67, %v371
    %v394 = vsub.f32 %v103, %v388
    %v395 = vsub.f32 %v68, %v371
    %v396 = vsub.f32 %v104, %v388
    %v397 = vsub.f32 %v69, %v371
    %v398 = vsub.f32 %v105, %v388
    %v399 = vmul.f32 %v391, %v391
    %v400 = vmul.f32 %v392, %v392
    %v401 = vmul.f32 %v393, %v393
    %v402 = vmul.f32 %v394, %v394
    %v403 = vmul.f32 %v395, %v395
    %v404 = vmul.f32 %v396, %v396
    %v405 = vmul.f32 %v397, %v397
    %v406 = vmul.f32 %v398, %v398
    %v415 = vcombine.high %v399, %v399
    %v417 = vunpack.c.l.s4 1983009808
    %v418 = vunpack.c.0.s8 %v417
    %v419 = vlaneseq
    %v420 = vshrl.u32 %v419, 7
    %v421 = vsub.s32 %v418, %v420
    %v422 = vrot.slane %v399, %v421
    %v424 = vunpack.c.l.s4 1983009808
    %v425 = vunpack.c.0.s8 %v424
    %v426 = vlaneseq
    %v427 = vshrl.u32 %v426, 7
    %v428 = vsub.s32 %v425, %v427
    %v429 = vrot.slane %v415, %v428
    %v430 = vcombine.high %v422, %v422
    %v431 = vcombine.high %v429, %v429
    %v432 = vcombine.high %v400, %v400
    %v434 = vunpack.c.l.s4 1983009808
    %v435 = vunpack.c.0.s8 %v434
    %v436 = vlaneseq
    %v437 = vshrl.u32 %v436, 7
    %v438 = vsub.s32 %v435, %v437
    %v439 = vrot.slane %v400, %v438
    %v441 = vunpack.c.l.s4 1983009808
    %v442 = vunpack.c.0.s8 %v441
    %v443 = vlaneseq
    %v444 = vshrl.u32 %v443, 7
    %v445 = vsub.s32 %v442, %v444
    %v446 = vrot.slane %v432, %v445
    %v447 = vcombine.high %v439, %v439
    %v448 = vcombine.high %v446, %v446
    %v449 = vcombine.high %v401, %v401
    %v451 = vunpack.c.l.s4 1983009808
    %v452 = vunpack.c.0.s8 %v451
    %v453 = vlaneseq
    %v454 = vshrl.u32 %v453, 7
    %v455 = vsub.s32 %v452, %v454
    %v456 = vrot.slane %v401, %v455
    %v458 = vunpack.c.l.s4 1983009808
    %v459 = vunpack.c.0.s8 %v458
    %v460 = vlaneseq
    %v461 = vshrl.u32 %v460, 7
    %v462 = vsub.s32 %v459, %v461
    %v463 = vrot.slane %v449, %v462
    %v464 = vcombine.high %v456, %v456
    %v465 = vcombine.high %v463, %v463
    %v466 = vcombine.high %v402, %v402
    %v468 = vunpack.c.l.s4 1983009808
    %v469 = vunpack.c.0.s8 %v468
    %v470 = vlaneseq
    %v471 = vshrl.u32 %v470, 7
    %v472 = vsub.s32 %v469, %v471
    %v473 = vrot.slane %v402, %v472
    %v475 = vunpack.c.l.s4 1983009808
    %v476 = vunpack.c.0.s8 %v475
    %v477 = vlaneseq
    %v478 = vshrl.u32 %v477, 7
    %v479 = vsub.s32 %v476, %v478
    %v480 = vrot.slane %v466, %v479
    %v481 = vcombine.high %v473, %v473
    %v482 = vcombine.high %v480, %v480
    %v483 = vcombine.high %v403, %v403
    %v485 = vunpack.c.l.s4 1983009808
    %v486 = vunpack.c.0.s8 %v485
    %v487 = vlaneseq
    %v488 = vshrl.u32 %v487, 7
    %v489 = vsub.s32 %v486, %v488
    %v490 = vrot.slane %v403, %v489
    %v492 = vunpack.c.l.s4 1983009808
    %v493 = vunpack.c.0.s8 %v492
    %v494 = vlaneseq
    %v495 = vshrl.u32 %v494, 7
    %v496 = vsub.s32 %v493, %v495
    %v497 = vrot.slane %v483, %v496
    %v498 = vcombine.high %v490, %v490
    %v499 = vcombine.high %v497, %v497
    %v500 = vcombine.high %v404, %v404
    %v502 = vunpack.c.l.s4 1983009808
    %v503 = vunpack.c.0.s8 %v502
    %v504 = vlaneseq
    %v505 = vshrl.u32 %v504, 7
    %v506 = vsub.s32 %v503, %v505
    %v507 = vrot.slane %v404, %v506
    %v509 = vunpack.c.l.s4 1983009808
    %v510 = vunpack.c.0.s8 %v509
    %v511 = vlaneseq
    %v512 = vshrl.u32 %v511, 7
    %v513 = vsub.s32 %v510, %v512
    %v514 = vrot.slane %v500, %v513
    %v515 = vcombine.high %v507, %v507
    %v516 = vcombine.high %v514, %v514
    %v517 = vcombine.high %v405, %v405
    %v519 = vunpack.c.l.s4 1983009808
    %v520 = vunpack.c.0.s8 %v519
    %v521 = vlaneseq
    %v522 = vshrl.u32 %v521, 7
    %v523 = vsub.s32 %v520, %v522
    %v524 = vrot.slane %v405, %v523
    %v526 = vunpack.c.l.s4 1983009808
    %v527 = vunpack.c.0.s8 %v526
    %v528 = vlaneseq
    %v529 = vshrl.u32 %v528, 7
    %v530 = vsub.s32 %v527, %v529
    %v531 = vrot.slane %v517, %v530
    %v532 = vcombine.high %v524, %v524
    %v533 = vcombine.high %v531, %v531
    %v534 = vcombine.high %v406, %v406
    %v536 = vunpack.c.l.s4 1983009808
    %v537 = vunpack.c.0.s8 %v536
    %v538 = vlaneseq
    %v539 = vshrl.u32 %v538, 7
    %v540 = vsub.s32 %v537, %v539
    %v541 = vrot.slane %v406, %v540
    %v543 = vunpack.c.l.s4 1983009808
    %v544 = vunpack.c.0.s8 %v543
    %v545 = vlaneseq
    %v546 = vshrl.u32 %v545, 7
    %v547 = vsub.s32 %v544, %v546
    %v548 = vrot.slane %v534, %v547
    %v549 = vcombine.high %v541, %v541
    %v550 = vcombine.high %v548, %v548
    %v583 = vsel %vm282, %v422, 0.0
    %v584 = vsel %vm282, %v456, 0.0
    %v585 = vadd.f32 %v583, %v584
    %v586 = vsel %vm282, %v490, 0.0
    %v587 = vadd.f32 %v585, %v586
    %v588 = vsel %vm282, %v524, 0.0
    %v589 = vadd.f32 %v587, %v588
    %v590 = vsel %vm282, %v430, 0.0
    %v591 = vsel %vm282, %v464, 0.0
    %v592 = vadd.f32 %v590, %v591
    %v593 = vsel %vm282, %v498, 0.0
    %v594 = vadd.f32 %v592, %v593
    %v595 = vsel %vm282, %v532, 0.0
    %v596 = vadd.f32 %v594, %v595
    %v597 = vsel %vm282, %v429, 0.0
    %v598 = vsel %vm282, %v463, 0.0
    %v599 = vadd.f32 %v597, %v598
    %v600 = vsel %vm282, %v497, 0.0
    %v601 = vadd.f32 %v599, %v600
    %v602 = vsel %vm282, %v531, 0.0
    %v603 = vadd.f32 %v601, %v602
    %v604 = vsel %vm282, %v431, 0.0
    %v605 = vsel %vm282, %v465, 0.0
    %v606 = vadd.f32 %v604, %v605
    %v607 = vsel %vm282, %v499, 0.0
    %v608 = vadd.f32 %v606, %v607
    %v609 = vsel %vm282, %v533, 0.0
    %v610 = vadd.f32 %v608, %v609
    %v611 = vsel %vm282, %v439, 0.0
    %v612 = vsel %vm282, %v473, 0.0
    %v613 = vadd.f32 %v611, %v612
    %v614 = vsel %vm282, %v507, 0.0
    %v615 = vadd.f32 %v613, %v614
    %v616 = vsel %vm282, %v541, 0.0
    %v617 = vadd.f32 %v615, %v616
    %v618 = vsel %vm282, %v447, 0.0
    %v619 = vsel %vm282, %v481, 0.0
    %v620 = vadd.f32 %v618, %v619
    %v621 = vsel %vm282, %v515, 0.0
    %v622 = vadd.f32 %v620, %v621
    %v623 = vsel %vm282, %v549, 0.0
    %v624 = vadd.f32 %v622, %v623
    %v625 = vsel %vm282, %v446, 0.0
    %v626 = vsel %vm282, %v480, 0.0
    %v627 = vadd.f32 %v625, %v626
    %v628 = vsel %vm282, %v514, 0.0
    %v629 = vadd.f32 %v627, %v628
    %v630 = vsel %vm282, %v548, 0.0
    %v631 = vadd.f32 %v629, %v630
    %v632 = vsel %vm282, %v448, 0.0
    %v633 = vsel %vm282, %v482, 0.0
    %v634 = vadd.f32 %v632, %v633
    %v635 = vsel %vm282, %v516, 0.0
    %v636 = vadd.f32 %v634, %v635
    %v637 = vsel %vm282, %v550, 0.0
    %v638 = vadd.f32 %v636, %v637
    %v639 = vmul.f32 %v589, 0.25
    %v640 = vmul.f32 %v596, 0.25
    %v641 = vmul.f32 %v603, 0.25
    %v642 = vmul.f32 %v610, 0.25
    %v643 = vmul.f32 %v617, 0.25
    %v644 = vmul.f32 %v624, 0.25
    %v645 = vmul.f32 %v631, 0.25
    %v646 = vmul.f32 %v638, 0.25
    %v647 = vadd.f32 %v639, 1e-08
    %v648 = vadd.f32 %v640, 1e-08
    %v649 = vadd.f32 %v641, 1e-08
    %v650 = vadd.f32 %v642, 1e-08
    %v651 = vadd.f32 %v643, 1e-08
    %v652 = vadd.f32 %v644, 1e-08
    %v653 = vadd.f32 %v645, 1e-08
    %v654 = vadd.f32 %v646, 1e-08
    %v655 = vrsqrt.pop %v647
    %v656 = vmul.f32 %v647, %v655
    %vm657 = vcmp.eq.f32.partialorder %v647, inf
    %v658 = vsel %vm657, %v647, %v656
    %vm659 = vcmp.eq.f32.partialorder %v647, 0.0
    %v660 = vand.u32 %v647, 2147483648
    %v661 = vsel %vm659, %v660, %v658
    %v662 = vrsqrt.pop %v648
    %v663 = vmul.f32 %v648, %v662
    %vm664 = vcmp.eq.f32.partialorder %v648, inf
    %v665 = vsel %vm664, %v648, %v663
    %vm666 = vcmp.eq.f32.partialorder %v648, 0.0
    %v667 = vand.u32 %v648, 2147483648
    %v668 = vsel %vm666, %v667, %v665
    %v669 = vrsqrt.pop %v649
    %v670 = vmul.f32 %v649, %v669
    %vm671 = vcmp.eq.f32.partialorder %v649, inf
    %v672 = vsel %vm671, %v649, %v670
    %vm673 = vcmp.eq.f32.partialorder %v649, 0.0
    %v674 = vand.u32 %v649, 2147483648
    %v675 = vsel %vm673, %v674, %v672
    %v676 = vrsqrt.pop %v650
    %v677 = vmul.f32 %v650, %v676
    %vm678 = vcmp.eq.f32.partialorder %v650, inf
    %v679 = vsel %vm678, %v650, %v677
    %vm680 = vcmp.eq.f32.partialorder %v650, 0.0
    %v681 = vand.u32 %v650, 2147483648
    %v682 = vsel %vm680, %v681, %v679
    %v683 = vrsqrt.pop %v651
    %v684 = vmul.f32 %v651, %v683
    %vm685 = vcmp.eq.f32.partialorder %v651, inf
    %v686 = vsel %vm685, %v651, %v684
    %vm687 = vcmp.eq.f32.partialorder %v651, 0.0
    %v688 = vand.u32 %v651, 2147483648
    %v689 = vsel %vm687, %v688, %v686
    %v690 = vrsqrt.pop %v652
    %v691 = vmul.f32 %v652, %v690
    %vm692 = vcmp.eq.f32.partialorder %v652, inf
    %v693 = vsel %vm692, %v652, %v691
    %vm694 = vcmp.eq.f32.partialorder %v652, 0.0
    %v695 = vand.u32 %v652, 2147483648
    %v696 = vsel %vm694, %v695, %v693
    %v697 = vrsqrt.pop %v653
    %v698 = vmul.f32 %v653, %v697
    %vm699 = vcmp.eq.f32.partialorder %v653, inf
    %v700 = vsel %vm699, %v653, %v698
    %vm701 = vcmp.eq.f32.partialorder %v653, 0.0
    %v702 = vand.u32 %v653, 2147483648
    %v703 = vsel %vm701, %v702, %v700
    %v704 = vrsqrt.pop %v654
    %v705 = vmul.f32 %v654, %v704
    %vm706 = vcmp.eq.f32.partialorder %v654, inf
    %v707 = vsel %vm706, %v654, %v705
    %vm708 = vcmp.eq.f32.partialorder %v654, 0.0
    %v709 = vand.u32 %v654, 2147483648
    %v710 = vsel %vm708, %v709, %v707
    %v711 = vlaneseq
    %v712 = vand.u32 %v711, 127
    %v713 = vadd.s32 %v712, 128
    %v714 = vadd.s32 %v712, 256
    %v715 = vadd.s32 %v712, 384
    %v716 = vadd.s32 %v712, 512
    %v717 = vadd.s32 %v712, 640
    %v718 = vadd.s32 %v712, 768
    %v719 = vadd.s32 %v712, 896
    %s720 = smul.u32 0, 1024
    %v721 = vstv %s720
    %v722 = vadd.s32 %v712, %v721
    %v723 = vadd.s32 %v713, %v721
    %v724 = vadd.s32 %v714, %v721
    %v725 = vadd.s32 %v715, %v721
    %v726 = vadd.s32 %v716, %v721
    %v727 = vadd.s32 %v717, %v721
    %v728 = vadd.s32 %v718, %v721
    %v729 = vadd.s32 %v719, %v721
    %vm730 = vcmp.lt.s32.totalorder %v722, 1024
    %vm731 = vcmp.lt.s32.totalorder %v723, 1024
    %vm732 = vcmp.lt.s32.totalorder %v724, 1024
    %vm733 = vcmp.lt.s32.totalorder %v725, 1024
    %vm734 = vcmp.lt.s32.totalorder %v726, 1024
    %vm735 = vcmp.lt.s32.totalorder %v727, 1024
    %vm736 = vcmp.lt.s32.totalorder %v728, 1024
    %vm737 = vcmp.lt.s32.totalorder %v729, 1024
    %v738 = vsel %vm730, 1, 0
    %v739 = vsel %vm731, 1, 0
    %v740 = vsel %vm732, 1, 0
    %v741 = vsel %vm733, 1, 0
    %v742 = vsel %vm734, 1, 0
    %v743 = vsel %vm735, 1, 0
    %v744 = vsel %vm736, 1, 0
    %v745 = vsel %vm737, 1, 0
    %vm746 = vcmp.eq.s32.totalorder %v738, 1
    %vm747 = vcmp.eq.s32.totalorder %v739, 1
    %vm748 = vcmp.eq.s32.totalorder %v740, 1
    %vm749 = vcmp.eq.s32.totalorder %v741, 1
    %vm750 = vcmp.eq.s32.totalorder %v742, 1
    %vm751 = vcmp.eq.s32.totalorder %v743, 1
    %vm752 = vcmp.eq.s32.totalorder %v744, 1
    %vm753 = vcmp.eq.s32.totalorder %v745, 1
    %v754 = vsel %vm746, %v661, 0.0
    %v755 = vsel %vm747, %v668, 0.0
    %v756 = vsel %vm748, %v675, 0.0
    %v757 = vsel %vm749, %v682, 0.0
    %v758 = vsel %vm750, %v689, 0.0
    %v759 = vsel %vm751, %v696, 0.0
    %v760 = vsel %vm752, %v703, 0.0
    %v761 = vsel %vm753, %v710, 0.0
    %v762 = vsel %vm282, %v754, 0.0
    %v763 = vsel %vm282, %v755, 0.0
    %v764 = vadd.f32 %v762, %v763
    %v765 = vsel %vm282, %v756, 0.0
    %v766 = vadd.f32 %v764, %v765
    %v767 = vsel %vm282, %v757, 0.0
    %v768 = vadd.f32 %v766, %v767
    %v769 = vsel %vm282, %v758, 0.0
    %v770 = vadd.f32 %v768, %v769
    %v771 = vsel %vm282, %v759, 0.0
    %v772 = vadd.f32 %v770, %v771
    %v773 = vsel %vm282, %v760, 0.0
    %v774 = vadd.f32 %v772, %v773
    %v775 = vsel %vm282, %v761, 0.0
    %v776 = vadd.f32 %v774, %v775
    %777 = vadd.xlane.f32.xlu0 %v776
    %v778 = vpop.xlane.xlu0 %777
    %779 = vst [vmem:[%s2] sm:$0x3] %v778
    // Predicated region
    $region6: #{minibatch_stddev.2} parent=1 // pred_check
      _
    $region7: #{minibatch_stddev.2} parent=1 // pred_check_branch
      %781 = sbr.rel (0) target = $region9
    $region8: #{minibatch_stddev.2} parent=1 // pred_region
      // Predicated region
      $region10: #{minibatch_stddev.2} parent=8 // pred_check
        _
      $region11: #{minibatch_stddev.2} parent=8 // pred_check_branch
        %783 = sbr.rel (0) target = $region13
      $region12: #{minibatch_stddev.2} parent=8 // pred_region
        // Predicated region
        $region14: #{minibatch_stddev.2} parent=12 // pred_check
          _
        $region15: #{minibatch_stddev.2} parent=12 // pred_check_branch
          %785 = sbr.rel (0) target = $region17
        $region16: #{minibatch_stddev.2} parent=12 // pred_region
          loop: start=0, step=1, limit=1
          $region18: #{minibatch_stddev.2} parent=16 // loop_pre_header
            _
          $region19: #{minibatch_stddev.2} parent=16 // loop_header
            %s787 = sphi 0, %s791
            %p788 = scmp.ge.s32.totalorder %s787, 1
            %s792 = sphi [#allocation2], [#allocation2]
            %s793 = sphi %s1, %s1
          $region20: #{minibatch_stddev.2} parent=16 // loop_header_branch
            %790 = sbr.rel (%p788) target = $region24
          $region21: #{minibatch_stddev.2} parent=16 // loop_body
            %v794 = vld [vmem:[%s792] sm:$0xff]
            %795 = vst [vmem:[%s793] sm:$0xff] %v794
            %v796 = vld [vmem:[%s792 + $0x8] sm:$0xff]
            %797 = vst [vmem:[%s793 + $0x8] sm:$0xff] %v796
            %v798 = vld [vmem:[%s792 + $0x10] sm:$0xff]
            %799 = vst [vmem:[%s793 + $0x10] sm:$0xff] %v798
            %v800 = vld [vmem:[%s792 + $0x18] sm:$0xff]
            %801 = vst [vmem:[%s793 + $0x18] sm:$0xff] %v800
            %v802 = vld [vmem:[%s792 + $0x20] sm:$0xff]
            %803 = vst [vmem:[%s793 + $0x20] sm:$0xff] %v802
            %v804 = vld [vmem:[%s792 + $0x28] sm:$0xff]
            %805 = vst [vmem:[%s793 + $0x28] sm:$0xff] %v804
            %v806 = vld [vmem:[%s792 + $0x30] sm:$0xff]
            %807 = vst [vmem:[%s793 + $0x30] sm:$0xff] %v806
            %v808 = vld [vmem:[%s792 + $0x38] sm:$0xff]
            %809 = vst [vmem:[%s793 + $0x38] sm:$0xff] %v808
          $region22: #{minibatch_stddev.2} parent=16 // loop_footer
            %s791 = sadd.s32 1, %s787
          $region23: #{minibatch_stddev.2} parent=16 // loop_footer_branch
            %786 = sbr.rel target = $region19
          $region24: #{minibatch_stddev.2} parent=16 // loop_exit
            _
        $region17: #{minibatch_stddev.2} parent=12 // pred_fallthru
          _
        // Predicated region
        $region25: #{minibatch_stddev.2} parent=12 // pred_check
          _
        $region26: #{minibatch_stddev.2} parent=12 // pred_check_branch
          %811 = sbr.rel target = $region28
        $region27: #{minibatch_stddev.2} parent=12 // pred_region
          _
        $region28: #{minibatch_stddev.2} parent=12 // pred_fallthru
          _
      $region13: #{minibatch_stddev.2} parent=8 // pred_fallthru
        _
      %812 = vnop
    $region9: #{minibatch_stddev.2} parent=1 // pred_fallthru
      _
    // Predicated region
    $region29: #{minibatch_stddev.2} parent=1 // pred_check
      _
    $region30: #{minibatch_stddev.2} parent=1 // pred_check_branch
      %814 = sbr.rel (0) target = $region32
    $region31: #{minibatch_stddev.2} parent=1 // pred_region
      _
    $region32: #{minibatch_stddev.2} parent=1 // pred_fallthru
      _
    // Predicated region
    $region33: #{minibatch_stddev.2} parent=1 // pred_check
      _
    $region34: #{minibatch_stddev.2} parent=1 // pred_check_branch
      %816 = sbr.rel (0) target = $region36
    $region35: #{minibatch_stddev.2} parent=1 // pred_region
      _
    $region36: #{minibatch_stddev.2} parent=1 // pred_fallthru
      _
    // Predicated region
    $region37: #{minibatch_stddev.2} parent=1 // pred_check
      _
    $region38: #{minibatch_stddev.2} parent=1 // pred_check_branch
      %818 = sbr.rel (0) target = $region40
    $region39: #{minibatch_stddev.2} parent=1 // pred_region
      _
    $region40: #{minibatch_stddev.2} parent=1 // pred_fallthru
      _

</llo_original>
